<compile_context>
chip_gen: v7x
topology: tpu7x:2x2x1
jax: 0.10.0
libtpu: 0.0.40
codegen_flags: <defaults>
</compile_context>

<pallas_src>
import functools

import jax
import jax.numpy as jnp
from jax.experimental import pallas as pl
from jax.experimental.pallas import tpu as pltpu


def _round_up(v: int, m: int) -> int:
    return (v + m - 1) // m * m


def _l2_kernel(x_ref, w_ref, wsq_ref, o_ref, acc_ref, xsq_ref, *, square: bool):
    k = pl.program_id(2)

    @pl.when(k == 0)
    def _init():
        acc_ref[...] = jnp.zeros_like(acc_ref)
        xsq_ref[...] = jnp.zeros_like(xsq_ref)

    x = x_ref[...]                                    # (tm, tk) native dtype
    w = w_ref[...]                                    # (tk, tn) native dtype

    # MXU matmul in native dtype, f32 accumulation.
    acc_ref[...] += jnp.dot(x, w, preferred_element_type=jnp.float32)

    # ||x||^2 partial sum over this K tile, accumulated in f32.
    xf = x.astype(jnp.float32)
    xsq_ref[...] += jnp.sum(xf * xf, axis=-1, keepdims=True)

    @pl.when(k == pl.num_programs(2) - 1)
    def _finalize():
        out = xsq_ref[...] + wsq_ref[...].astype(jnp.float32) - 2.0 * acc_ref[...]
        if not square:
            # Matches torch .pow(0.5): slightly negative fp residue -> NaN.
            out = jnp.sqrt(out)
        o_ref[...] = out.astype(o_ref.dtype)


def l2_linear(x: jax.Array, label_embeds: jax.Array, *, square: bool = False,
              tm: int = 256, tn: int = 512, tk: int = 512) -> jax.Array:
    """Pallas implementation of L2Linear.forward."""
    bsz, embed_dim = x.shape
    embed_dim2, num_labels = label_embeds.shape
    assert embed_dim == embed_dim2, "Inner dimensions must match"
    out_dtype = x.dtype

    # Tile sizes: sublane-/lane-aligned, clipped to the (padded) problem size.
    tm = min(tm, _round_up(bsz, 16))          # multiple of 16 (ok for f32/bf16)
    tn = min(tn, _round_up(num_labels, 128))  # lane-dense output tile
    d128 = _round_up(embed_dim, 128)
    tk = d128 if d128 <= 1024 else tk         # single K step for modest D

    b_pad = _round_up(bsz, tm)
    n_pad = _round_up(num_labels, tn)
    k_pad = _round_up(embed_dim, tk)

    # Zero padding is exact: padded rows/cols/inner-dims contribute nothing.
    xp = x if (b_pad, k_pad) == (bsz, embed_dim) else jnp.pad(
        x, ((0, b_pad - bsz), (0, k_pad - embed_dim)))
    wp = label_embeds if (k_pad, n_pad) == (embed_dim, num_labels) else jnp.pad(
        label_embeds, ((0, k_pad - embed_dim), (0, n_pad - num_labels)))

    # ||w||^2 per label, hoisted out of the batch loop (computed once, f32).
    w_sq = jnp.sum(wp.astype(jnp.float32) ** 2, axis=0, keepdims=True)  # (1, n_pad)

    grid = (b_pad // tm, n_pad // tn, k_pad // tk)
    kernel = functools.partial(_l2_kernel, square=square)

    out = pl.pallas_call(
        kernel,
        out_shape=jax.ShapeDtypeStruct((b_pad, n_pad), out_dtype),
        grid_spec=pltpu.PrefetchScalarGridSpec(
            num_scalar_prefetch=0,
            grid=grid,
            in_specs=[
                pl.BlockSpec((tm, tk), lambda i, j, k: (i, k)),   # X tile
                pl.BlockSpec((tk, tn), lambda i, j, k: (k, j)),   # W tile
                pl.BlockSpec((1, tn), lambda i, j, k: (0, j)),    # ||w||^2 row
            ],
            out_specs=pl.BlockSpec((tm, tn), lambda i, j, k: (i, j)),
            scratch_shapes=[
                pltpu.VMEM((tm, tn), jnp.float32),   # matmul accumulator
                pltpu.VMEM((tm, 1), jnp.float32),    # ||x||^2 accumulator
            ],
        ),
        compiler_params=pltpu.CompilerParams(
            dimension_semantics=("parallel", "parallel", "arbitrary")),
    )(xp, wp, w_sq)

    return out[:bsz, :num_labels]


def l2_linear_ref(x, label_embeds, *, square=False):
    out = (-2.0 * jnp.dot(x, label_embeds, precision=jax.lax.Precision.HIGHEST)
           + jnp.sum(x * x, axis=-1, keepdims=True)
           + jnp.sum(label_embeds * label_embeds, axis=0))
    if not square:
        out = jnp.sqrt(out)
    return out


if __name__ == "__main__":
    # Small deterministic config mirroring
    # nn.Parameter(torch.Tensor(embed_dim, num_labels).uniform_(-1, 1)).
    bsz, embed_dim, num_labels = 16, 32, 16
    square = False

    key = jax.random.PRNGKey(0)
    kx, kw = jax.random.split(key)
    x = jax.random.normal(kx, (bsz, embed_dim), dtype=jnp.float32)
    label_embeds = jax.random.uniform(
        kw, (embed_dim, num_labels), minval=-1.0, maxval=1.0, dtype=jnp.float32)

    out = l2_linear(x, label_embeds, square=square)
    out = jax.block_until_ready(out)

    ref = l2_linear_ref(x, label_embeds, square=square)
    assert out.shape == (bsz, num_labels)
    assert jnp.allclose(out, ref, atol=5e-3, rtol=1e-3), "mismatch vs reference"

    print("KERNEL_OK")
</pallas_src>

<mosaic_0001>
module attributes {stable_mosaic.version = 11 : i64} {
  func.func @_l2_kernel(%arg0: i32, %arg1: i32, %arg2: i32, %arg3: memref<16x128xf32, #tpu.memory_space<vmem>>, %arg4: memref<128x128xf32, #tpu.memory_space<vmem>>, %arg5: memref<1x128xf32, #tpu.memory_space<vmem>>, %arg6: memref<16x128xf32, #tpu.memory_space<vmem>>, %arg7: memref<16x128xf32, #tpu.memory_space<vmem>>, %arg8: memref<16x1xf32, #tpu.memory_space<vmem>>) attributes {dimension_semantics = [#tpu.dimension_semantics<parallel>, #tpu.dimension_semantics<parallel>, #tpu.dimension_semantics<arbitrary>], iteration_bounds = array<i64: 1, 1, 1>, scalar_prefetch = 0 : i64, scratch_operands = 2 : i64, tpu.core_type = #tpu.core_type<tc>, window_params = [{transform_indices = @transform_0, window_bounds = array<i64: 16, 128>}, {transform_indices = @transform_1, window_bounds = array<i64: 128, 128>}, {transform_indices = @transform_2, window_bounds = array<i64: 1, 128>}, {transform_indices = @transform_3, window_bounds = array<i64: 16, 128>}]} {
    %c0_i32 = arith.constant 0 : i32
    %0 = arith.cmpi eq, %arg2, %c0_i32 : i32
    %1 = arith.extui %0 : i1 to i32
    %c0_i32_0 = arith.constant 0 : i32
    %2 = arith.cmpi ne, %1, %c0_i32_0 : i32
    scf.if %2 {
      %cst_15 = arith.constant 0.000000e+00 : f32
      %18 = vector.broadcast %cst_15 : f32 to vector<16x128xf32>
      %c0_16 = arith.constant 0 : index
      %c0_17 = arith.constant 0 : index
      %19 = vector.load %arg7[%c0_16, %c0_17] : memref<16x128xf32, #tpu.memory_space<vmem>>, vector<16x128xf32>
      tpu.vector_store %arg7[%c0_16, %c0_17], %18 {strides = array<i32>} : memref<16x128xf32, #tpu.memory_space<vmem>>, vector<16x128xf32>,
      %cst_18 = arith.constant 0.000000e+00 : f32
      %20 = vector.broadcast %cst_18 : f32 to vector<16x1xf32>
      %c0_19 = arith.constant 0 : index
      %c0_20 = arith.constant 0 : index
      %21 = vector.load %arg8[%c0_19, %c0_20] : memref<16x1xf32, #tpu.memory_space<vmem>>, vector<16x1xf32>
      tpu.vector_store %arg8[%c0_19, %c0_20], %20 {strides = array<i32>} : memref<16x1xf32, #tpu.memory_space<vmem>>, vector<16x1xf32>,
    } else {
    }
    %c0 = arith.constant 0 : index
    %c0_1 = arith.constant 0 : index
    %3 = vector.load %arg3[%c0, %c0_1] : memref<16x128xf32, #tpu.memory_space<vmem>>, vector<16x128xf32>
    %c0_2 = arith.constant 0 : index
    %c0_3 = arith.constant 0 : index
    %4 = vector.load %arg4[%c0_2, %c0_3] : memref<128x128xf32, #tpu.memory_space<vmem>>, vector<128x128xf32>
    %c0_4 = arith.constant 0 : index
    %c0_5 = arith.constant 0 : index
    %5 = vector.load %arg7[%c0_4, %c0_5] : memref<16x128xf32, #tpu.memory_space<vmem>>, vector<16x128xf32>
    %cst = arith.constant dense<0.000000e+00> : vector<16x128xf32>
    %6 = tpu.matmul %3, %4, %cst {dimension_numbers = #tpu.dot_dimension_numbers<[1], [0], [0], [1], [0, 0, 1, 1], [], []>} : vector<16x128xf32>, vector<128x128xf32>, vector<16x128xf32> -> vector<16x128xf32>
    %7 = arith.addf %5, %6 : vector<16x128xf32>
    %c0_6 = arith.constant 0 : index
    %c0_7 = arith.constant 0 : index
    %8 = vector.load %arg7[%c0_6, %c0_7] : memref<16x128xf32, #tpu.memory_space<vmem>>, vector<16x128xf32>
    tpu.vector_store %arg7[%c0_6, %c0_7], %7 {strides = array<i32>} : memref<16x128xf32, #tpu.memory_space<vmem>>, vector<16x128xf32>,
    %c0_8 = arith.constant 0 : index
    %c0_9 = arith.constant 0 : index
    %9 = vector.load %arg8[%c0_8, %c0_9] : memref<16x1xf32, #tpu.memory_space<vmem>>, vector<16x1xf32>
    %10 = arith.mulf %3, %3 : vector<16x128xf32>
    %cst_10 = arith.constant dense<0.000000e+00> : vector<16xf32>
    %11 = vector.multi_reduction <add>, %10, %cst_10 [1] : vector<16x128xf32> to vector<16xf32>
    %12 = vector.shape_cast %11 : vector<16xf32> to vector<16x1xf32>
    %13 = arith.addf %9, %12 : vector<16x1xf32>
    %c0_11 = arith.constant 0 : index
    %c0_12 = arith.constant 0 : index
    %14 = vector.load %arg8[%c0_11, %c0_12] : memref<16x1xf32, #tpu.memory_space<vmem>>, vector<16x1xf32>
    tpu.vector_store %arg8[%c0_11, %c0_12], %13 {strides = array<i32>} : memref<16x1xf32, #tpu.memory_space<vmem>>, vector<16x1xf32>,
    %c0_i32_13 = arith.constant 0 : i32
    %15 = arith.cmpi eq, %arg2, %c0_i32_13 : i32
    %16 = arith.extui %15 : i1 to i32
    %c0_i32_14 = arith.constant 0 : i32
    %17 = arith.cmpi ne, %16, %c0_i32_14 : i32
    scf.if %17 {
      %c0_15 = arith.constant 0 : index
      %c0_16 = arith.constant 0 : index
      %18 = vector.load %arg8[%c0_15, %c0_16] : memref<16x1xf32, #tpu.memory_space<vmem>>, vector<16x1xf32>
      %c0_17 = arith.constant 0 : index
      %c0_18 = arith.constant 0 : index
      %19 = vector.load %arg5[%c0_17, %c0_18] : memref<1x128xf32, #tpu.memory_space<vmem>>, vector<1x128xf32>
      %20 = vector.broadcast %18 : vector<16x1xf32> to vector<16x128xf32>
      %21 = vector.broadcast %19 : vector<1x128xf32> to vector<16x128xf32>
      %22 = arith.addf %20, %21 : vector<16x128xf32>
      %c0_19 = arith.constant 0 : index
      %c0_20 = arith.constant 0 : index
      %23 = vector.load %arg7[%c0_19, %c0_20] : memref<16x128xf32, #tpu.memory_space<vmem>>, vector<16x128xf32>
      %cst_21 = arith.constant 2.000000e+00 : f32
      %24 = vector.broadcast %cst_21 : f32 to vector<16x128xf32>
      %25 = arith.mulf %24, %23 : vector<16x128xf32>
      %26 = arith.subf %22, %25 : vector<16x128xf32>
      %27 = math.sqrt %26 : vector<16x128xf32>
      %c0_22 = arith.constant 0 : index
      %c0_23 = arith.constant 0 : index
      %28 = vector.load %arg6[%c0_22, %c0_23] : memref<16x128xf32, #tpu.memory_space<vmem>>, vector<16x128xf32>
      tpu.vector_store %arg6[%c0_22, %c0_23], %27 {strides = array<i32>} : memref<16x128xf32, #tpu.memory_space<vmem>>, vector<16x128xf32>,
    } else {
    }
    return
  }
  func.func @transform_0(%arg0: i32, %arg1: i32, %arg2: i32) -> (i32, i32) {
    %c0_i32 = arith.constant 0 : i32
    return %arg0, %arg2 : i32, i32
  }
  func.func @transform_1(%arg0: i32, %arg1: i32, %arg2: i32) -> (i32, i32) {
    %c0_i32 = arith.constant 0 : i32
    return %arg2, %arg1 : i32, i32
  }
  func.func @transform_2(%arg0: i32, %arg1: i32, %arg2: i32) -> (i32, i32) {
    %c0_i32 = arith.constant 0 : i32
    %c0_i32_0 = arith.constant 0 : i32
    return %c0_i32, %arg1 : i32, i32
  }
  func.func @transform_3(%arg0: i32, %arg1: i32, %arg2: i32) -> (i32, i32) {
    %c0_i32 = arith.constant 0 : i32
    return %arg0, %arg1 : i32, i32
  }
}

</mosaic_0001>

<llo_original>
// kernel: tpu_custom_call.1
$region0: #{tpu_custom_call.1}
  #allocation0 [shape = 'u32[]', space=smem, size = 0x4, offset = 0x4, fixed_abs, tag = 'smem constant byte address 0x4 - core index']
  #allocation1 [shape = 'u32[144,128]{1,0:T(1,128)}', space=vmem, size = 0x12000, scoped, tag = 'internal scratch']
  #allocation2 [shape = 'f32[16,128]{1,0:T(8,128)}', space=vmem, size = 0x2000, scoped, tag = 'scratch operand']
  #allocation3 [shape = 'f32[16,1]{1,0:T(8,128)}', space=vmem, size = 0x2000, scoped, tag = 'scratch operand']
  %s0 = inlined_call_operand.hbm [shape: f32[16,128], index: 0, kind: input, shape index: {}]
  %s1 = inlined_call_operand.hbm [shape: f32[128,128], index: 1, kind: input, shape index: {}]
  %s2 = inlined_call_operand.vmem [shape: f32[1,128], index: 2, kind: input, shape index: {}]
  %s3 = inlined_call_operand.hbm [shape: f32[16,128], index: 3, kind: output, shape index: {}]
  %s4 = sld [smem:[#allocation0]]
  $region38: #{tpu_custom_call.1} parent=0
    _
  %s6 = ssub.s32 1, %s4
  %s7 = scalar_select 0, %s6, %s4
  $region1: #{tpu_custom_call.1} parent=0
    #allocation4 [shape = 'u8[8192]{0}', space=vmem, size = 0x2000, scoped, tag = 'input window, operand 0, single buffered']
    #allocation5 [shape = 's32[1]{0}', space=sflag, size = 0x4, scoped, tag = 'scoped memory for tpu_custom_call.1']
    #allocation6 [shape = 's32[1]{0}', space=sflag, size = 0x4, scoped, tag = 'scoped memory for tpu_custom_call.1']
    #allocation7 [shape = 'u8[65536]{0}', space=vmem, size = 0x10000, scoped, tag = 'input window, operand 1, single buffered']
    #allocation8 [shape = 's32[1]{0}', space=sflag, size = 0x4, scoped, tag = 'scoped memory for tpu_custom_call.1']
    #allocation9 [shape = 'u8[8192]{0}', space=vmem, size = 0x2000, scoped, tag = 'output window, operand 0, single buffered']
    %8 = vsyncpa [#allocation5], 0
    %9 = vsyncpa [#allocation8], 0
    %10 = vsyncpa [#allocation6], 0
    // Predicated region
    $region2: #{tpu_custom_call.1} parent=1 // pred_check
      _
    $region3: #{tpu_custom_call.1} parent=1 // pred_check_branch
      %12 = sbr.rel (0) target = $region5
    $region4: #{tpu_custom_call.1} parent=1 // pred_region
      %s14 = ssub.s32 256, 256
      %15 = vsyncadd [#allocation5], %s14
      %s16 = sshll.u32 [#allocation4], 4
      %s17 = int_to_ptr.vmem [resolvable:$true] %s16
      %22 = dma.hbm_to_vmem [thread:$0]  %s0, 256, %s17, [#allocation5], 128, 128, 8
    $region5: #{tpu_custom_call.1} parent=1 // pred_fallthru
      _
    // Predicated region
    $region6: #{tpu_custom_call.1} parent=1 // pred_check
      _
    $region7: #{tpu_custom_call.1} parent=1 // pred_check_branch
      %24 = sbr.rel (0) target = $region9
    $region8: #{tpu_custom_call.1} parent=1 // pred_region
      %s26 = ssub.s32 2048, 2048
      %27 = vsyncadd [#allocation8], %s26
      %s28 = sshll.u32 [#allocation7], 4
      %s29 = int_to_ptr.vmem [resolvable:$true] %s28
      %34 = dma.hbm_to_vmem [thread:$0]  %s1, 2048, %s29, [#allocation8], 128, 128, 8
    $region9: #{tpu_custom_call.1} parent=1 // pred_fallthru
      _
    // Predicated region
    $region10: #{tpu_custom_call.1} parent=1 // pred_check
      _
    $region11: #{tpu_custom_call.1} parent=1 // pred_check_branch
      %36 = sbr.rel (0) target = $region13
    $region12: #{tpu_custom_call.1} parent=1 // pred_region
      _
    $region13: #{tpu_custom_call.1} parent=1 // pred_fallthru
      _
    // Predicated region
    $region14: #{tpu_custom_call.1} parent=1 // pred_check
      _
    $region15: #{tpu_custom_call.1} parent=1 // pred_check_branch
      %38 = sbr.rel (0) target = $region17
    $region16: #{tpu_custom_call.1} parent=1 // pred_region
      %39 = dma.done [#allocation5], 256
    $region17: #{tpu_custom_call.1} parent=1 // pred_fallthru
      _
    // Predicated region
    $region18: #{tpu_custom_call.1} parent=1 // pred_check
      _
    $region19: #{tpu_custom_call.1} parent=1 // pred_check_branch
      %41 = sbr.rel (0) target = $region21
    $region20: #{tpu_custom_call.1} parent=1 // pred_region
      %42 = dma.done [#allocation8], 2048
    $region21: #{tpu_custom_call.1} parent=1 // pred_fallthru
      _
    %p43 = scmp.eq.s32.totalorder 0, 0
    // Predicated region
    $region22: #{tpu_custom_call.1} parent=1 // pred_check
      %p44 = pneg %p43
    $region23: #{tpu_custom_call.1} parent=1 // pred_check_branch
      %46 = sbr.rel (%p44) target = $region25
    $region24: #{tpu_custom_call.1} parent=1 // pred_region
      %47 = vst [vmem:[#allocation2] sm:$0xff] 0.0
      %48 = vst [vmem:[#allocation2 + $0x8] sm:$0xff] 0.0
      %vm49 = vcmask 7168
      %50 = vst.msk [vmem:[#allocation3] sm:$0xff] %vm49, 0.0
      %51 = vst.msk [vmem:[#allocation3 + $0x8] sm:$0xff] %vm49, 0.0
    $region25: #{tpu_custom_call.1} parent=1 // pred_fallthru
      _
    %v52 = vld [vmem:[#allocation4] sm:$0xff]
    %v53 = vld [vmem:[#allocation4 + $0x8] sm:$0xff]
    %v54 = vld [vmem:[#allocation7] sm:$0xff]
    %v55 = vld [vmem:[#allocation7 + $0x8] sm:$0xff]
    %v56 = vld [vmem:[#allocation7 + $0x10] sm:$0xff]
    %v57 = vld [vmem:[#allocation7 + $0x18] sm:$0xff]
    %v58 = vld [vmem:[#allocation7 + $0x20] sm:$0xff]
    %v59 = vld [vmem:[#allocation7 + $0x28] sm:$0xff]
    %v60 = vld [vmem:[#allocation7 + $0x30] sm:$0xff]
    %v61 = vld [vmem:[#allocation7 + $0x38] sm:$0xff]
    %v62 = vld [vmem:[#allocation7 + $0x40] sm:$0xff]
    %v63 = vld [vmem:[#allocation7 + $0x48] sm:$0xff]
    %v64 = vld [vmem:[#allocation7 + $0x50] sm:$0xff]
    %v65 = vld [vmem:[#allocation7 + $0x58] sm:$0xff]
    %v66 = vld [vmem:[#allocation7 + $0x60] sm:$0xff]
    %v67 = vld [vmem:[#allocation7 + $0x68] sm:$0xff]
    %v68 = vld [vmem:[#allocation7 + $0x70] sm:$0xff]
    %v69 = vld [vmem:[#allocation7 + $0x78] sm:$0xff]
    %v70 = vld [vmem:[#allocation2] sm:$0xff]
    %v71 = vld [vmem:[#allocation2 + $0x8] sm:$0xff]
    %72 = vmatprep.subr.mxu0 0.0
    %73 = vmatpush1.msra.mxu0 %v54
    %74 = vmatprep.subr.mxu0 0.0
    %75 = vmatpush1.msra.mxu0 %v55
    %76 = vmatprep.subr.mxu0 0.0
    %77 = vmatpush1.msra.mxu0 %v56
    %78 = vmatprep.subr.mxu0 0.0
    %79 = vmatpush1.msra.mxu0 %v57
    %80 = vmatprep.subr.mxu0 0.0
    %81 = vmatpush1.msra.mxu0 %v58
    %82 = vmatprep.subr.mxu0 0.0
    %83 = vmatpush1.msra.mxu0 %v59
    %84 = vmatprep.subr.mxu0 0.0
    %85 = vmatpush1.msra.mxu0 %v60
    %86 = vmatprep.subr.mxu0 0.0
    %87 = vmatpush1.msra.mxu0 %v61
    %88 = vmatprep.subr.mxu0 0.0
    %89 = vmatpush1.msra.mxu0 %v62
    %90 = vmatprep.subr.mxu0 0.0
    %91 = vmatpush1.msra.mxu0 %v63
    %92 = vmatprep.subr.mxu0 0.0
    %93 = vmatpush1.msra.mxu0 %v64
    %94 = vmatprep.subr.mxu0 0.0
    %95 = vmatpush1.msra.mxu0 %v65
    %96 = vmatprep.subr.mxu0 0.0
    %97 = vmatpush1.msra.mxu0 %v66
    %98 = vmatprep.subr.mxu0 0.0
    %99 = vmatpush1.msra.mxu0 %v67
    %100 = vmatprep.subr.mxu0 0.0
    %101 = vmatpush1.msra.mxu0 %v68
    %102 = vmatprep.subr.mxu0 0.0
    %103 = vmatpush1.msra.mxu0 %v69
    %104 = vmatprep.subr.mxu0 0.0
    %105 = vmatpush1.msra.mxu0 0.0
    %106 = vmatprep.subr.mxu0 0.0
    %107 = vmatpush1.msra.mxu0 0.0
    %108 = vmatprep.subr.mxu0 0.0
    %109 = vmatpush1.msra.mxu0 0.0
    %110 = vmatprep.subr.mxu0 0.0
    %111 = vmatpush1.msra.mxu0 0.0
    %112 = vmatprep.subr.mxu0 0.0
    %113 = vmatpush1.msra.mxu0 0.0
    %114 = vmatprep.subr.mxu0 0.0
    %115 = vmatpush1.msra.mxu0 0.0
    %116 = vmatprep.subr.mxu0 0.0
    %117 = vmatpush1.msra.mxu0 0.0
    %118 = vmatprep.subr.mxu0 0.0
    %119 = vmatpush1.msra.mxu0 0.0
    %120 = vmatprep.subr.mxu0 0.0
    %121 = vmatpush1.msra.mxu0 0.0
    %122 = vmatprep.subr.mxu0 0.0
    %123 = vmatpush1.msra.mxu0 0.0
    %124 = vmatprep.subr.mxu0 0.0
    %125 = vmatpush1.msra.mxu0 0.0
    %126 = vmatprep.subr.mxu0 0.0
    %127 = vmatpush1.msra.mxu0 0.0
    %128 = vmatprep.subr.mxu0 0.0
    %129 = vmatpush1.msra.mxu0 0.0
    %130 = vmatprep.subr.mxu0 0.0
    %131 = vmatpush1.msra.mxu0 0.0
    %132 = vmatprep.subr.mxu0 0.0
    %133 = vmatpush1.msra.mxu0 0.0
    %134 = vmatprep.subr.mxu0 0.0
    %135 = vmatpush1.msra.mxu0 0.0
    %136 = vmatprep.mubr.f32.mxu0 0.0
    %137 = vmatmul.mubr.f32.gmra.mrb[0].mxu0 %v52
    %v138 = vpop.f32.mrb[0].mxu0
    %v139 = vadd.f32 0.0, %v138
    %v140 = vpop.f32.mrb[0].mxu0
    %141 = vmatprep.mubr.f32.mxu0 0.0
    %142 = vmatmul.mubr.f32.gmra.mrb[0].mxu0 %v53
    %v143 = vpop.f32.mrb[0].mxu0
    %v144 = vadd.f32 0.0, %v143
    %v145 = vpop.f32.mrb[0].mxu0
    %146 = vdwg.mxu0
    %v147 = vadd.f32 %v70, %v139
    %v148 = vadd.f32 %v71, %v144
    %149 = vst [vmem:[#allocation2] sm:$0xff] %v147
    %150 = vst [vmem:[#allocation2 + $0x8] sm:$0xff] %v148
    %v151 = vld [vmem:[#allocation3] sm:$0xff]
    %v152 = vld [vmem:[#allocation3 + $0x8] sm:$0xff]
    %v153 = vmul.f32 %v52, %v52
    %v154 = vmul.f32 %v53, %v53
    %155 = vadd.xlane.f32.xlu0 %v153
    %v156 = vpop.xlane.xlu0 %155
    %157 = vadd.xlane.f32.xlu0 %v154
    %v158 = vpop.xlane.xlu0 %157
    %v159 = vadd.f32 %v151, %v156
    %v160 = vadd.f32 %v152, %v158
    %vm161 = vcmask 7168
    %162 = vst.msk [vmem:[#allocation3] sm:$0xff] %vm161, %v159
    %163 = vst.msk [vmem:[#allocation3 + $0x8] sm:$0xff] %vm161, %v160
    // Predicated region
    $region26: #{tpu_custom_call.1} parent=1 // pred_check
      %p164 = pneg %p43
    $region27: #{tpu_custom_call.1} parent=1 // pred_check_branch
      %166 = sbr.rel (%p164) target = $region29
    $region28: #{tpu_custom_call.1} parent=1 // pred_region
      %v167 = vld [vmem:[#allocation3] sm:$0xff]
      %v168 = vld [vmem:[#allocation3 + $0x8] sm:$0xff]
      %v169 = vld [vmem:[%s2] sm:$0x1]
      %171 = vset.pattern.permute.xlu0 0
      %172 = vperm.xlu0 %171, %v167
      %v173 = vpop.permute.xlu0 %172
      %176 = vset.pattern.permute.xlu0 0
      %177 = vperm.xlu0 %176, %v168
      %v178 = vpop.permute.xlu0 %177
      %v181 = vlaneseq
      %v182 = vshrl.u32 %v181, 7
      %v183 = vsub.s32 0, %v182
      %v184 = vrot.slane %v169, %v183
      %v186 = vadd.f32 %v173, %v184
      %v187 = vadd.f32 %v178, %v184
      %v188 = vld [vmem:[#allocation2] sm:$0xff]
      %v189 = vld [vmem:[#allocation2 + $0x8] sm:$0xff]
      %v190 = vmul.f32 %v188, 2.0
      %v191 = vmul.f32 %v189, 2.0
      %v192 = vsub.f32 %v186, %v190
      %v193 = vsub.f32 %v187, %v191
      %v194 = vrsqrt.pop %v192
      %v195 = vmul.f32 %v192, %v194
      %vm196 = vcmp.eq.f32.partialorder %v192, inf
      %v197 = vsel %vm196, %v192, %v195
      %vm198 = vcmp.eq.f32.partialorder %v192, 0.0
      %v199 = vand.u32 %v192, 2147483648
      %v200 = vsel %vm198, %v199, %v197
      %v201 = vrsqrt.pop %v193
      %v202 = vmul.f32 %v193, %v201
      %vm203 = vcmp.eq.f32.partialorder %v193, inf
      %v204 = vsel %vm203, %v193, %v202
      %vm205 = vcmp.eq.f32.partialorder %v193, 0.0
      %v206 = vand.u32 %v193, 2147483648
      %v207 = vsel %vm205, %v206, %v204
      %208 = vst [vmem:[#allocation9] sm:$0xff] %v200
      %209 = vst [vmem:[#allocation9 + $0x8] sm:$0xff] %v207
    $region29: #{tpu_custom_call.1} parent=1 // pred_fallthru
      _
    // Predicated region
    $region30: #{tpu_custom_call.1} parent=1 // pred_check
      _
    $region31: #{tpu_custom_call.1} parent=1 // pred_check_branch
      %211 = sbr.rel (0) target = $region33
    $region32: #{tpu_custom_call.1} parent=1 // pred_region
      %s213 = ssub.s32 256, 256
      %214 = vsyncadd [#allocation6], %s213
      %s215 = sshll.u32 [#allocation9], 4
      %s216 = int_to_ptr.vmem [resolvable:$true] %s215
      %221 = dma.vmem_to_hbm [thread:$0]  %s216, 256, %s3, [#allocation6], 128, 128, 8
    $region33: #{tpu_custom_call.1} parent=1 // pred_fallthru
      _
    // Predicated region
    $region34: #{tpu_custom_call.1} parent=1 // pred_check
      _
    $region35: #{tpu_custom_call.1} parent=1 // pred_check_branch
      %223 = sbr.rel (0) target = $region37
    $region36: #{tpu_custom_call.1} parent=1 // pred_region
      %224 = dma.done [#allocation6], 256
    $region37: #{tpu_custom_call.1} parent=1 // pred_fallthru
      _
    %225 = vsyncpa [#allocation5], 1
    %226 = vsyncpa [#allocation8], 1
    %227 = vsyncpa [#allocation6], 1

</llo_original>
